<compile_context>
chip_gen: v7x
topology: tpu7x:2x2x1
jax: 0.10.0
libtpu: 0.0.40
codegen_flags: <defaults>
</compile_context>

<pallas_src>
import functools

import jax
import jax.numpy as jnp
from jax.experimental import pallas as pl
from jax.experimental.pallas import tpu as pltpu


# ---------------------------------------------------------------------------
# Kernel
# ---------------------------------------------------------------------------
def heart_mlp_kernel(
    x_ref,
    w1_ref, b1_ref,
    w2_ref, b2_ref,
    w3_ref, b3_ref,
    w4_ref, b4_ref,
    o_ref,
):
    # Layer 1: (fc1 + bn1 folded) -> relu      (dropout = identity in eval)
    x = x_ref[...].astype(jnp.bfloat16)
    h = jnp.dot(x, w1_ref[...], preferred_element_type=jnp.float32) + b1_ref[...]
    h = jnp.maximum(h, 0.0)

    # Layer 2: (fc2 + bn2 folded) -> relu
    h = jnp.dot(h.astype(jnp.bfloat16), w2_ref[...],
                preferred_element_type=jnp.float32) + b2_ref[...]
    h = jnp.maximum(h, 0.0)

    # Layer 3: (fc3 + bn3 folded) -> relu
    h = jnp.dot(h.astype(jnp.bfloat16), w3_ref[...],
                preferred_element_type=jnp.float32) + b3_ref[...]
    h = jnp.maximum(h, 0.0)

    # Layer 4: fc4 (64 -> 1) -> sigmoid.
    # out_features == 1, so a VPU multiply + lane reduce beats an N=1 MXU
    # matmul (which would waste 127/128 MXU columns).
    z = jnp.sum(h * w4_ref[...], axis=-1, keepdims=True) + b4_ref[...]
    o_ref[...] = jax.nn.sigmoid(z)


# ---------------------------------------------------------------------------
# One-time parameter packing (BN fold + transpose + bf16 cast)
# ---------------------------------------------------------------------------
def pack_params(params, eps=1e-5):
    """Fold BatchNorm into the Linear layers and pack for the kernel.

    Returns (w1, b1, w2, b2, w3, b3, w4, b4) with:
      w{1,2,3}: [in, out] bfloat16   (BN scale folded into columns)
      b{1,2,3}: [1, out]  float32    (BN shift folded in)
      w4:       [1, 64]   float32    (used on the VPU, kept f32)
      b4:       [1, 1]    float32
    """
    def fold(w, b, g, beta, m, v):
        s = g / jnp.sqrt(v + eps)                       # [out]
        w_f = (w.T * s[None, :]).astype(jnp.bfloat16)   # [in, out]
        b_f = ((b - m) * s + beta)[None, :].astype(jnp.float32)
        return w_f, b_f

    w1, b1 = fold(params["w1"], params["b1"], params["bn1_g"], params["bn1_b"],
                  params["bn1_m"], params["bn1_v"])
    w2, b2 = fold(params["w2"], params["b2"], params["bn2_g"], params["bn2_b"],
                  params["bn2_m"], params["bn2_v"])
    w3, b3 = fold(params["w3"], params["b3"], params["bn3_g"], params["bn3_b"],
                  params["bn3_m"], params["bn3_v"])
    w4 = params["w4"].astype(jnp.float32)               # [1, 64] (PyTorch layout)
    b4 = params["b4"].reshape(1, 1).astype(jnp.float32)
    return (w1, b1, w2, b2, w3, b3, w4, b4)


# ---------------------------------------------------------------------------
# Forward wrapper
# ---------------------------------------------------------------------------
def _round_up(n, m):
    return ((n + m - 1) // m) * m


@functools.partial(jax.jit, static_argnames=("block_b",))
def heart_disease_nn_forward(x, packed, block_b=1024):
    """x: [B, input_size] float32. packed: output of pack_params().

    block_b is a cap on the per-step batch tile (sweep {512, 1024, 2048};
    v5e may prefer the lower end because of its single vector-store slot).
    """
    assert block_b % 16 == 0 and block_b >= 16, "block_b must be a multiple of 16"
    w1, b1, w2, b2, w3, b3, w4, b4 = packed
    B, F = x.shape

    # --- Tile selection: derive tb from B instead of padding B up to block_b.
    n_steps = pl.cdiv(B, block_b)
    # Keep the grid even (>= 2) when there is enough work so v7x's two
    # TensorCores both stay busy; neutral on v5e/v6e (grid is just a loop).
    if B >= 32:
        n_steps = max(2, n_steps)
        if n_steps % 2 == 1:
            n_steps += 1
    # Multiple of 16: the matmul LHS is bf16 and a bf16 vreg packs 16 sublanes.
    tb = _round_up(pl.cdiv(B, n_steps), 16)
    b_pad = n_steps * tb
    if b_pad != B:
        x = jnp.pad(x, ((0, b_pad - B), (0, 0)))
    grid = (n_steps,)

    weights = (w1, b1, w2, b2, w3, b3, w4, b4)

    def resident(a):
        # Same block every grid step -> loaded once, stays in VMEM.
        # Single-buffered: the block index never changes, so a second buffer
        # and per-step revisit bookkeeping would be pure waste.
        return pl.BlockSpec(a.shape, lambda i: (0, 0),
                            pipeline_mode=pl.Buffered(1))

    flops = 2 * b_pad * (F * 256 + 256 * 128 + 128 * 64 + 64)
    bytes_accessed = (
        b_pad * F * 4 + b_pad * 1 * 4
        + sum(int(a.size) * a.dtype.itemsize for a in weights)
    )

    out = pl.pallas_call(
        heart_mlp_kernel,
        out_shape=jax.ShapeDtypeStruct((b_pad, 1), jnp.float32),
        grid=grid,
        in_specs=[
            pl.BlockSpec((tb, F), lambda i: (i, 0)),   # x: batch-tiled
            resident(w1), resident(b1),
            resident(w2), resident(b2),
            resident(w3), resident(b3),
            resident(w4), resident(b4),
        ],
        out_specs=pl.BlockSpec((tb, 1), lambda i: (i, 0)),
        compiler_params=pltpu.CompilerParams(
            dimension_semantics=("parallel",),
        ),
        cost_estimate=pl.CostEstimate(
            flops=flops, transcendentals=b_pad, bytes_accessed=bytes_accessed),
    )(x, *weights)

    return out[:B]


# ---------------------------------------------------------------------------
# Synthetic parameters + pure-JAX reference (eval-mode PyTorch semantics)
# ---------------------------------------------------------------------------
def make_params(key, input_size):
    ks = jax.random.split(key, 8)

    def lin(kw, kb, fan_in, fan_out):
        bound = 1.0 / jnp.sqrt(fan_in)
        w = jax.random.uniform(kw, (fan_out, fan_in), jnp.float32, -bound, bound)
        b = jax.random.uniform(kb, (fan_out,), jnp.float32, -bound, bound)
        return w, b

    w1, b1 = lin(ks[0], ks[1], input_size, 256)
    w2, b2 = lin(ks[2], ks[3], 256, 128)
    w3, b3 = lin(ks[4], ks[5], 128, 64)
    w4, b4 = lin(ks[6], ks[7], 64, 1)

    def bn(n, k):
        km, kv = jax.random.split(k)
        return (
            jnp.ones((n,), jnp.float32),                              # gamma
            jnp.zeros((n,), jnp.float32),                             # beta
            0.1 * jax.random.normal(km, (n,), jnp.float32),           # running_mean
            1.0 + 0.05 * jax.random.uniform(kv, (n,), jnp.float32),   # running_var
        )

    kb1, kb2, kb3 = jax.random.split(jax.random.fold_in(key, 99), 3)
    bn1_g, bn1_b, bn1_m, bn1_v = bn(256, kb1)
    bn2_g, bn2_b, bn2_m, bn2_v = bn(128, kb2)
    bn3_g, bn3_b, bn3_m, bn3_v = bn(64, kb3)

    return dict(
        w1=w1, b1=b1, w2=w2, b2=b2, w3=w3, b3=b3, w4=w4, b4=b4,
        bn1_g=bn1_g, bn1_b=bn1_b, bn1_m=bn1_m, bn1_v=bn1_v,
        bn2_g=bn2_g, bn2_b=bn2_b, bn2_m=bn2_m, bn2_v=bn2_v,
        bn3_g=bn3_g, bn3_b=bn3_b, bn3_m=bn3_m, bn3_v=bn3_v,
    )


def reference_forward(x, params):
    eps = 1e-5

    def layer(h, w, b, g, bt, m, v):
        h = h @ w.T + b
        h = (h - m) / jnp.sqrt(v + eps) * g + bt
        return jnp.maximum(h, 0.0)

    h = layer(x, params["w1"], params["b1"], params["bn1_g"], params["bn1_b"],
              params["bn1_m"], params["bn1_v"])
    h = layer(h, params["w2"], params["b2"], params["bn2_g"], params["bn2_b"],
              params["bn2_m"], params["bn2_v"])
    h = layer(h, params["w3"], params["b3"], params["bn3_g"], params["bn3_b"],
              params["bn3_m"], params["bn3_v"])
    return jax.nn.sigmoid(h @ params["w4"].T + params["b4"])


# ---------------------------------------------------------------------------
if __name__ == "__main__":
    key = jax.random.PRNGKey(0)
    input_size = 13   # classic heart-disease feature count
    batch = 8

    kx, kp = jax.random.split(key)
    x = jax.random.normal(kx, (batch, input_size), jnp.float32)
    params = make_params(kp, input_size)

    # One-time packing (BN fold + transpose + bf16 weights); reused every call.
    packed = pack_params(params)
    packed = jax.tree_util.tree_map(jax.block_until_ready, packed)

    # Small demo batch (B=8 -> grid=(1,), tb=16)
    out = heart_disease_nn_forward(x, packed)
    out = jax.block_until_ready(out)
    ref = reference_forward(x, params)
    assert out.shape == (batch, 1)
    # bf16 weights -> relaxed tolerance vs the f32 reference.
    assert jnp.allclose(out, ref, atol=1e-2, rtol=1e-2), (out, ref)

    # Larger batch: B=600 -> grid=(2,), tb=304, only 8 padded rows (was 424).
    x_big = jax.random.normal(jax.random.fold_in(key, 7), (600, input_size), jnp.float32)
    out_big = jax.block_until_ready(heart_disease_nn_forward(x_big, packed))
    ref_big = reference_forward(x_big, params)
    assert out_big.shape == (600, 1)
    assert jnp.allclose(out_big, ref_big, atol=1e-2, rtol=1e-2)

    print("KERNEL_OK")
</pallas_src>

<mosaic_0001>
module attributes {stable_mosaic.version = 11 : i64} {
  func.func @heart_mlp_kernel(%arg0: i32, %arg1: memref<16x13xf32, #tpu.memory_space<vmem>>, %arg2: memref<13x256xbf16, #tpu.memory_space<vmem>>, %arg3: memref<1x256xf32, #tpu.memory_space<vmem>>, %arg4: memref<256x128xbf16, #tpu.memory_space<vmem>>, %arg5: memref<1x128xf32, #tpu.memory_space<vmem>>, %arg6: memref<128x64xbf16, #tpu.memory_space<vmem>>, %arg7: memref<1x64xf32, #tpu.memory_space<vmem>>, %arg8: memref<1x64xf32, #tpu.memory_space<vmem>>, %arg9: memref<1x1xf32, #tpu.memory_space<vmem>>, %arg10: memref<16x1xf32, #tpu.memory_space<vmem>>) attributes {dimension_semantics = [#tpu.dimension_semantics<parallel>], iteration_bounds = array<i64: 1>, scalar_prefetch = 0 : i64, scratch_operands = 0 : i64, tpu.core_type = #tpu.core_type<tc>, window_params = [{transform_indices = @transform_0, window_bounds = array<i64: 16, 13>}, {pipeline_mode = #tpu.pipeline_mode<synchronous>, transform_indices = @transform_1, window_bounds = array<i64: 13, 256>}, {pipeline_mode = #tpu.pipeline_mode<synchronous>, transform_indices = @transform_2, window_bounds = array<i64: 1, 256>}, {pipeline_mode = #tpu.pipeline_mode<synchronous>, transform_indices = @transform_3, window_bounds = array<i64: 256, 128>}, {pipeline_mode = #tpu.pipeline_mode<synchronous>, transform_indices = @transform_4, window_bounds = array<i64: 1, 128>}, {pipeline_mode = #tpu.pipeline_mode<synchronous>, transform_indices = @transform_5, window_bounds = array<i64: 128, 64>}, {pipeline_mode = #tpu.pipeline_mode<synchronous>, transform_indices = @transform_6, window_bounds = array<i64: 1, 64>}, {pipeline_mode = #tpu.pipeline_mode<synchronous>, transform_indices = @transform_7, window_bounds = array<i64: 1, 64>}, {pipeline_mode = #tpu.pipeline_mode<synchronous>, transform_indices = @transform_8, window_bounds = array<i64: 1, 1>}, {transform_indices = @transform_9, window_bounds = array<i64: 16, 1>}]} {
    %c0 = arith.constant 0 : index
    %c0_0 = arith.constant 0 : index
    %0 = vector.load %arg1[%c0, %c0_0] : memref<16x13xf32, #tpu.memory_space<vmem>>, vector<16x13xf32>
    %1 = arith.truncf %0 : vector<16x13xf32> to vector<16x13xbf16>
    %c0_1 = arith.constant 0 : index
    %c0_2 = arith.constant 0 : index
    %2 = vector.load %arg2[%c0_1, %c0_2] : memref<13x256xbf16, #tpu.memory_space<vmem>>, vector<13x256xbf16>
    %cst = arith.constant dense<0.000000e+00> : vector<16x256xf32>
    %3 = tpu.matmul %1, %2, %cst {dimension_numbers = #tpu.dot_dimension_numbers<[1], [0], [0], [1], [0, 0, 1, 1], [], []>} : vector<16x13xbf16>, vector<13x256xbf16>, vector<16x256xf32> -> vector<16x256xf32>
    %c0_3 = arith.constant 0 : index
    %c0_4 = arith.constant 0 : index
    %4 = vector.load %arg3[%c0_3, %c0_4] : memref<1x256xf32, #tpu.memory_space<vmem>>, vector<1x256xf32>
    %5 = vector.broadcast %4 : vector<1x256xf32> to vector<16x256xf32>
    %6 = arith.addf %3, %5 : vector<16x256xf32>
    %cst_5 = arith.constant 0.000000e+00 : f32
    %7 = vector.broadcast %cst_5 : f32 to vector<16x256xf32>
    %8 = arith.maximumf %6, %7 : vector<16x256xf32>
    %9 = arith.truncf %8 : vector<16x256xf32> to vector<16x256xbf16>
    %c0_6 = arith.constant 0 : index
    %c0_7 = arith.constant 0 : index
    %10 = vector.load %arg4[%c0_6, %c0_7] : memref<256x128xbf16, #tpu.memory_space<vmem>>, vector<256x128xbf16>
    %cst_8 = arith.constant dense<0.000000e+00> : vector<16x128xf32>
    %11 = tpu.matmul %9, %10, %cst_8 {dimension_numbers = #tpu.dot_dimension_numbers<[1], [0], [0], [1], [0, 0, 1, 1], [], []>} : vector<16x256xbf16>, vector<256x128xbf16>, vector<16x128xf32> -> vector<16x128xf32>
    %c0_9 = arith.constant 0 : index
    %c0_10 = arith.constant 0 : index
    %12 = vector.load %arg5[%c0_9, %c0_10] : memref<1x128xf32, #tpu.memory_space<vmem>>, vector<1x128xf32>
    %13 = vector.broadcast %12 : vector<1x128xf32> to vector<16x128xf32>
    %14 = arith.addf %11, %13 : vector<16x128xf32>
    %cst_11 = arith.constant 0.000000e+00 : f32
    %15 = vector.broadcast %cst_11 : f32 to vector<16x128xf32>
    %16 = arith.maximumf %14, %15 : vector<16x128xf32>
    %17 = arith.truncf %16 : vector<16x128xf32> to vector<16x128xbf16>
    %c0_12 = arith.constant 0 : index
    %c0_13 = arith.constant 0 : index
    %18 = vector.load %arg6[%c0_12, %c0_13] : memref<128x64xbf16, #tpu.memory_space<vmem>>, vector<128x64xbf16>
    %cst_14 = arith.constant dense<0.000000e+00> : vector<16x64xf32>
    %19 = tpu.matmul %17, %18, %cst_14 {dimension_numbers = #tpu.dot_dimension_numbers<[1], [0], [0], [1], [0, 0, 1, 1], [], []>} : vector<16x128xbf16>, vector<128x64xbf16>, vector<16x64xf32> -> vector<16x64xf32>
    %c0_15 = arith.constant 0 : index
    %c0_16 = arith.constant 0 : index
    %20 = vector.load %arg7[%c0_15, %c0_16] : memref<1x64xf32, #tpu.memory_space<vmem>>, vector<1x64xf32>
    %21 = vector.broadcast %20 : vector<1x64xf32> to vector<16x64xf32>
    %22 = arith.addf %19, %21 : vector<16x64xf32>
    %cst_17 = arith.constant 0.000000e+00 : f32
    %23 = vector.broadcast %cst_17 : f32 to vector<16x64xf32>
    %24 = arith.maximumf %22, %23 : vector<16x64xf32>
    %c0_18 = arith.constant 0 : index
    %c0_19 = arith.constant 0 : index
    %25 = vector.load %arg8[%c0_18, %c0_19] : memref<1x64xf32, #tpu.memory_space<vmem>>, vector<1x64xf32>
    %26 = vector.broadcast %25 : vector<1x64xf32> to vector<16x64xf32>
    %27 = arith.mulf %24, %26 : vector<16x64xf32>
    %cst_20 = arith.constant dense<0.000000e+00> : vector<16xf32>
    %28 = vector.multi_reduction <add>, %27, %cst_20 [1] : vector<16x64xf32> to vector<16xf32>
    %29 = vector.shape_cast %28 : vector<16xf32> to vector<16x1xf32>
    %c0_21 = arith.constant 0 : index
    %c0_22 = arith.constant 0 : index
    %30 = vector.load %arg9[%c0_21, %c0_22] : memref<1x1xf32, #tpu.memory_space<vmem>>, vector<1x1xf32>
    %31 = vector.broadcast %30 : vector<1x1xf32> to vector<16x1xf32>
    %32 = arith.addf %29, %31 : vector<16x1xf32>
    %33 = arith.negf %32 : vector<16x1xf32>
    %34 = math.exp %33 : vector<16x1xf32>
    %cst_23 = arith.constant 1.000000e+00 : f32
    %35 = vector.broadcast %cst_23 : f32 to vector<16x1xf32>
    %36 = arith.addf %35, %34 : vector<16x1xf32>
    %37 = arith.divf %35, %36 : vector<16x1xf32>
    %c0_24 = arith.constant 0 : index
    %c0_25 = arith.constant 0 : index
    %38 = vector.load %arg10[%c0_24, %c0_25] : memref<16x1xf32, #tpu.memory_space<vmem>>, vector<16x1xf32>
    tpu.vector_store %arg10[%c0_24, %c0_25], %37 {strides = array<i32>} : memref<16x1xf32, #tpu.memory_space<vmem>>, vector<16x1xf32>,
    return
  }
  func.func @transform_0(%arg0: i32) -> (i32, i32) {
    %c0_i32 = arith.constant 0 : i32
    %c0_i32_0 = arith.constant 0 : i32
    return %arg0, %c0_i32 : i32, i32
  }
  func.func @transform_1(%arg0: i32) -> (i32, i32) {
    %c0_i32 = arith.constant 0 : i32
    %c0_i32_0 = arith.constant 0 : i32
    %c0_i32_1 = arith.constant 0 : i32
    return %c0_i32, %c0_i32_0 : i32, i32
  }
  func.func @transform_2(%arg0: i32) -> (i32, i32) {
    %c0_i32 = arith.constant 0 : i32
    %c0_i32_0 = arith.constant 0 : i32
    %c0_i32_1 = arith.constant 0 : i32
    return %c0_i32, %c0_i32_0 : i32, i32
  }
  func.func @transform_3(%arg0: i32) -> (i32, i32) {
    %c0_i32 = arith.constant 0 : i32
    %c0_i32_0 = arith.constant 0 : i32
    %c0_i32_1 = arith.constant 0 : i32
    return %c0_i32, %c0_i32_0 : i32, i32
  }
  func.func @transform_4(%arg0: i32) -> (i32, i32) {
    %c0_i32 = arith.constant 0 : i32
    %c0_i32_0 = arith.constant 0 : i32
    %c0_i32_1 = arith.constant 0 : i32
    return %c0_i32, %c0_i32_0 : i32, i32
  }
  func.func @transform_5(%arg0: i32) -> (i32, i32) {
    %c0_i32 = arith.constant 0 : i32
    %c0_i32_0 = arith.constant 0 : i32
    %c0_i32_1 = arith.constant 0 : i32
    return %c0_i32, %c0_i32_0 : i32, i32
  }
  func.func @transform_6(%arg0: i32) -> (i32, i32) {
    %c0_i32 = arith.constant 0 : i32
    %c0_i32_0 = arith.constant 0 : i32
    %c0_i32_1 = arith.constant 0 : i32
    return %c0_i32, %c0_i32_0 : i32, i32
  }
  func.func @transform_7(%arg0: i32) -> (i32, i32) {
    %c0_i32 = arith.constant 0 : i32
    %c0_i32_0 = arith.constant 0 : i32
    %c0_i32_1 = arith.constant 0 : i32
    return %c0_i32, %c0_i32_0 : i32, i32
  }
  func.func @transform_8(%arg0: i32) -> (i32, i32) {
    %c0_i32 = arith.constant 0 : i32
    %c0_i32_0 = arith.constant 0 : i32
    %c0_i32_1 = arith.constant 0 : i32
    return %c0_i32, %c0_i32_0 : i32, i32
  }
  func.func @transform_9(%arg0: i32) -> (i32, i32) {
    %c0_i32 = arith.constant 0 : i32
    %c0_i32_0 = arith.constant 0 : i32
    return %arg0, %c0_i32 : i32, i32
  }
}

</mosaic_0001>

<llo_original>
// kernel: heart_disease_nn_forward.1
$region0: #{heart_disease_nn_forward.1}
  #allocation0 [shape = 'u32[]', space=smem, size = 0x4, offset = 0x4, fixed_abs, tag = 'smem constant byte address 0x4 - core index']
  #allocation1 [shape = 'u32[144,128]{1,0:T(1,128)}', space=vmem, size = 0x12000, scoped, tag = 'internal scratch']
  #allocation2 [shape = 'f32[1,1]{1,0:T(1,128)S(1)}', space=vmem, size = 0x200, scoped, tag = 'scoped memory for heart_disease_nn_forward.1']
  %s0 = inlined_call_operand.vmem [shape: f32[16,13], index: 0, kind: input, shape index: {}]
  %s1 = inlined_call_operand.hbm [shape: bf16[13,256], index: 1, kind: input, shape index: {}]
  %s2 = inlined_call_operand.vmem [shape: f32[1,256], index: 2, kind: input, shape index: {}]
  %s3 = inlined_call_operand.vmem [shape: bf16[256,128], index: 3, kind: input, shape index: {}]
  %s4 = inlined_call_operand.vmem [shape: f32[1,128], index: 4, kind: input, shape index: {}]
  %s5 = inlined_call_operand.vmem [shape: bf16[128,64], index: 5, kind: input, shape index: {}]
  %s6 = inlined_call_operand.vmem [shape: f32[1,64], index: 6, kind: input, shape index: {}]
  %s7 = inlined_call_operand.vmem [shape: f32[1,64], index: 7, kind: input, shape index: {}]
  %s8 = inlined_call_operand.<no memory space> [shape: f32[1,1], index: 8, kind: input, shape index: {}]
  %s9 = inlined_call_operand.vmem [shape: f32[16,1], index: 9, kind: output, shape index: {}]
  %s10 = sld [smem:[#allocation0]]
  $region50: #{heart_disease_nn_forward.1} parent=0
    _
  %s12 = ssub.s32 1, %s10
  %s13 = scalar_select 0, %s12, %s10
  %v14 = vstv %s8
  %15 = vst [vmem:[#allocation2] sm:$0x1] %v14
  $region1: #{heart_disease_nn_forward.1} parent=0
    #allocation3 [shape = 'u8[8192]{0}', space=vmem, size = 0x2000, scoped, tag = 'input window, operand 1, single buffered']
    #allocation4 [shape = 's32[1]{0}', space=sflag, size = 0x4, scoped, tag = 'scoped memory for heart_disease_nn_forward.1']
    %16 = vsyncpa [#allocation4], 0
    // Predicated region
    $region2: #{heart_disease_nn_forward.1} parent=1 // pred_check
      _
    $region3: #{heart_disease_nn_forward.1} parent=1 // pred_check_branch
      %18 = sbr.rel (0) target = $region5
    $region4: #{heart_disease_nn_forward.1} parent=1 // pred_region
      _
    $region5: #{heart_disease_nn_forward.1} parent=1 // pred_fallthru
      _
    // Predicated region
    $region6: #{heart_disease_nn_forward.1} parent=1 // pred_check
      _
    $region7: #{heart_disease_nn_forward.1} parent=1 // pred_check_branch
      %20 = sbr.rel (0) target = $region9
    $region8: #{heart_disease_nn_forward.1} parent=1 // pred_region
      %s22 = ssub.s32 256, 256
      %23 = vsyncadd [#allocation4], %s22
      %s24 = sshll.u32 [#allocation3], 4
      %s25 = int_to_ptr.vmem [resolvable:$true] %s24
      %30 = dma.hbm_to_vmem [thread:$0]  %s1, 256, %s25, [#allocation4], 128, 128, 8
    $region9: #{heart_disease_nn_forward.1} parent=1 // pred_fallthru
      _
    // Predicated region
    $region10: #{heart_disease_nn_forward.1} parent=1 // pred_check
      _
    $region11: #{heart_disease_nn_forward.1} parent=1 // pred_check_branch
      %32 = sbr.rel (0) target = $region13
    $region12: #{heart_disease_nn_forward.1} parent=1 // pred_region
      _
    $region13: #{heart_disease_nn_forward.1} parent=1 // pred_fallthru
      _
    // Predicated region
    $region14: #{heart_disease_nn_forward.1} parent=1 // pred_check
      _
    $region15: #{heart_disease_nn_forward.1} parent=1 // pred_check_branch
      %34 = sbr.rel (0) target = $region17
    $region16: #{heart_disease_nn_forward.1} parent=1 // pred_region
      _
    $region17: #{heart_disease_nn_forward.1} parent=1 // pred_fallthru
      _
    // Predicated region
    $region18: #{heart_disease_nn_forward.1} parent=1 // pred_check
      _
    $region19: #{heart_disease_nn_forward.1} parent=1 // pred_check_branch
      %36 = sbr.rel (0) target = $region21
    $region20: #{heart_disease_nn_forward.1} parent=1 // pred_region
      _
    $region21: #{heart_disease_nn_forward.1} parent=1 // pred_fallthru
      _
    // Predicated region
    $region22: #{heart_disease_nn_forward.1} parent=1 // pred_check
      _
    $region23: #{heart_disease_nn_forward.1} parent=1 // pred_check_branch
      %38 = sbr.rel (0) target = $region25
    $region24: #{heart_disease_nn_forward.1} parent=1 // pred_region
      _
    $region25: #{heart_disease_nn_forward.1} parent=1 // pred_fallthru
      _
    // Predicated region
    $region26: #{heart_disease_nn_forward.1} parent=1 // pred_check
      _
    $region27: #{heart_disease_nn_forward.1} parent=1 // pred_check_branch
      %40 = sbr.rel (0) target = $region29
    $region28: #{heart_disease_nn_forward.1} parent=1 // pred_region
      _
    $region29: #{heart_disease_nn_forward.1} parent=1 // pred_fallthru
      _
    // Predicated region
    $region30: #{heart_disease_nn_forward.1} parent=1 // pred_check
      _
    $region31: #{heart_disease_nn_forward.1} parent=1 // pred_check_branch
      %42 = sbr.rel (0) target = $region33
    $region32: #{heart_disease_nn_forward.1} parent=1 // pred_region
      _
    $region33: #{heart_disease_nn_forward.1} parent=1 // pred_fallthru
      _
    // Predicated region
    $region34: #{heart_disease_nn_forward.1} parent=1 // pred_check
      _
    $region35: #{heart_disease_nn_forward.1} parent=1 // pred_check_branch
      %44 = sbr.rel (0) target = $region37
    $region36: #{heart_disease_nn_forward.1} parent=1 // pred_region
      _
    $region37: #{heart_disease_nn_forward.1} parent=1 // pred_fallthru
      _
    // Predicated region
    $region38: #{heart_disease_nn_forward.1} parent=1 // pred_check
      _
    $region39: #{heart_disease_nn_forward.1} parent=1 // pred_check_branch
      %46 = sbr.rel (0) target = $region41
    $region40: #{heart_disease_nn_forward.1} parent=1 // pred_region
      %47 = dma.done [#allocation4], 256
    $region41: #{heart_disease_nn_forward.1} parent=1 // pred_fallthru
      _
    %v49 = vld [vmem:[%s0] sm:$0xff]
    %v50 = vld [vmem:[%s0 + $0x8] sm:$0xff]
    %v51 = vpack.c.bf16 %v50, %v49
    %v52 = vld [vmem:[#allocation3] sm:$0xff]
    %v53 = vld [vmem:[#allocation3 + $0x8] sm:$0x77]
    %v54 = vld [vmem:[%s2] sm:$0x3]
    %v56 = vlaneseq
    %v57 = vshrl.u32 %v56, 7
    %v58 = vsub.s32 0, %v57
    %v59 = vrot.slane %v54, %v58
    %v60 = vlaneseq
    %v61 = vshrl.u32 %v60, 7
    %v62 = vsub.s32 1, %v61
    %v63 = vrot.slane %v54, %v62
    %v68 = vunpack.c.l.b16 %v52
    %v69 = vunpack.c.h.b16 %v52
    %v70 = vunpack.c.l.b16 %v53
    %v71 = vunpack.c.h.b16 %v53
    %v72 = vpack.c.b16 %v70, %v68
    %v73 = vpack.c.b16 %v71, %v69
    %vm74 = vcmask 105472
    %v76 = vsel %vm74, %v51, 0
    %vm78 = vcmask 1045504
    %vm79 = vcmask 1046528
    %v80 = vsel %vm78, 4294967295, 65535
    %v81 = vsel %vm79, %v80, 0
    %v83 = vand.u32 %v72, %v81
    %v86 = vand.u32 %v73, %v81
    %88 = vmatprep.subr.bf16.mxu0 %v86
    %89 = vmatpush1.bf16.msra.mxu0 %v83
    %90 = vmatprep.subr.bf16.mxu0 0
    %91 = vmatpush1.bf16.msra.mxu0 0
    %92 = vmatprep.subr.bf16.mxu0 0
    %93 = vmatpush1.bf16.msra.mxu0 0
    %94 = vmatprep.subr.bf16.mxu0 0
    %95 = vmatpush1.bf16.msra.mxu0 0
    %96 = vmatprep.subr.bf16.mxu0 0
    %97 = vmatpush1.bf16.msra.mxu0 0
    %98 = vmatprep.subr.bf16.mxu0 0
    %99 = vmatpush1.bf16.msra.mxu0 0
    %100 = vmatprep.subr.bf16.mxu0 0
    %101 = vmatpush1.bf16.msra.mxu0 0
    %102 = vmatprep.subr.bf16.mxu0 0
    %103 = vmatpush1.bf16.msra.mxu0 0
    %104 = vmatprep.subr.bf16.mxu0 0
    %105 = vmatpush1.bf16.msra.mxu0 0
    %106 = vmatprep.subr.bf16.mxu0 0
    %107 = vmatpush1.bf16.msra.mxu0 0
    %108 = vmatprep.subr.bf16.mxu0 0
    %109 = vmatpush1.bf16.msra.mxu0 0
    %110 = vmatprep.subr.bf16.mxu0 0
    %111 = vmatpush1.bf16.msra.mxu0 0
    %112 = vmatprep.subr.bf16.mxu0 0
    %113 = vmatpush1.bf16.msra.mxu0 0
    %114 = vmatprep.subr.bf16.mxu0 0
    %115 = vmatpush1.bf16.msra.mxu0 0
    %116 = vmatprep.subr.bf16.mxu0 0
    %117 = vmatpush1.bf16.msra.mxu0 0
    %118 = vmatprep.subr.bf16.mxu0 0
    %119 = vmatpush1.bf16.msra.mxu0 0
    %120 = vmatprep.mubr.bf16.mxu0 0
    %121 = vmatmul.mubr.bf16.gmra.mrb[0].mxu0 %v76
    %v122 = vpop.f32.mrb[0].mxu0
    %v123 = vadd.f32 %v59, %v122
    %v124 = vpop.f32.mrb[0].mxu0
    %v125 = vadd.f32 %v63, %v124
    %v126 = vpop.f32.mrb[0].mxu0
    %v127 = vadd.f32 %v59, %v126
    %v128 = vpop.f32.mrb[0].mxu0
    %v129 = vadd.f32 %v63, %v128
    %130 = vdwg.mxu0
    %v131 = vmax.f32 %v123, 0.0
    %v132 = vmax.f32 %v125, 0.0
    %v133 = vmax.f32 %v127, 0.0
    %v134 = vmax.f32 %v129, 0.0
    %v135 = vpack.c.bf16 %v133, %v131
    %v136 = vpack.c.bf16 %v134, %v132
    %v137 = vld [vmem:[%s3] sm:$0xf]
    %v138 = vld [vmem:[%s3 + $0x4] sm:$0xf]
    %v139 = vld [vmem:[%s3 + $0x8] sm:$0xf]
    %v140 = vld [vmem:[%s3 + $0xc] sm:$0xf]
    %v141 = vld [vmem:[%s3 + $0x10] sm:$0xf]
    %v142 = vld [vmem:[%s3 + $0x14] sm:$0xf]
    %v143 = vld [vmem:[%s3 + $0x18] sm:$0xf]
    %v144 = vld [vmem:[%s3 + $0x1c] sm:$0xf]
    %v145 = vld [vmem:[%s3 + $0x20] sm:$0xf]
    %v146 = vld [vmem:[%s3 + $0x24] sm:$0xf]
    %v147 = vld [vmem:[%s3 + $0x28] sm:$0xf]
    %v148 = vld [vmem:[%s3 + $0x2c] sm:$0xf]
    %v149 = vld [vmem:[%s3 + $0x30] sm:$0xf]
    %v150 = vld [vmem:[%s3 + $0x34] sm:$0xf]
    %v151 = vld [vmem:[%s3 + $0x38] sm:$0xf]
    %v152 = vld [vmem:[%s3 + $0x3c] sm:$0xf]
    %v153 = vld [vmem:[%s3 + $0x40] sm:$0xf]
    %v154 = vld [vmem:[%s3 + $0x44] sm:$0xf]
    %v155 = vld [vmem:[%s3 + $0x48] sm:$0xf]
    %v156 = vld [vmem:[%s3 + $0x4c] sm:$0xf]
    %v157 = vld [vmem:[%s3 + $0x50] sm:$0xf]
    %v158 = vld [vmem:[%s3 + $0x54] sm:$0xf]
    %v159 = vld [vmem:[%s3 + $0x58] sm:$0xf]
    %v160 = vld [vmem:[%s3 + $0x5c] sm:$0xf]
    %v161 = vld [vmem:[%s3 + $0x60] sm:$0xf]
    %v162 = vld [vmem:[%s3 + $0x64] sm:$0xf]
    %v163 = vld [vmem:[%s3 + $0x68] sm:$0xf]
    %v164 = vld [vmem:[%s3 + $0x6c] sm:$0xf]
    %v165 = vld [vmem:[%s3 + $0x70] sm:$0xf]
    %v166 = vld [vmem:[%s3 + $0x74] sm:$0xf]
    %v167 = vld [vmem:[%s3 + $0x78] sm:$0xf]
    %v168 = vld [vmem:[%s3 + $0x7c] sm:$0xf]
    %v169 = vld [vmem:[%s4] sm:$0x1]
    %v171 = vlaneseq
    %v172 = vshrl.u32 %v171, 7
    %v173 = vsub.s32 0, %v172
    %v174 = vrot.slane %v169, %v173
    %v208 = vunpack.c.l.b16 %v137
    %v209 = vunpack.c.l.b16 %v138
    %v210 = vunpack.c.l.b16 %v139
    %v211 = vunpack.c.l.b16 %v140
    %v212 = vunpack.c.l.b16 %v141
    %v213 = vunpack.c.l.b16 %v142
    %v214 = vunpack.c.l.b16 %v143
    %v215 = vunpack.c.l.b16 %v144
    %v216 = vunpack.c.l.b16 %v145
    %v217 = vunpack.c.l.b16 %v146
    %v218 = vunpack.c.l.b16 %v147
    %v219 = vunpack.c.l.b16 %v148
    %v220 = vunpack.c.l.b16 %v149
    %v221 = vunpack.c.l.b16 %v150
    %v222 = vunpack.c.l.b16 %v151
    %v223 = vunpack.c.l.b16 %v152
    %v224 = vunpack.c.l.b16 %v153
    %v225 = vunpack.c.l.b16 %v154
    %v226 = vunpack.c.l.b16 %v155
    %v227 = vunpack.c.l.b16 %v156
    %v228 = vunpack.c.l.b16 %v157
    %v229 = vunpack.c.l.b16 %v158
    %v230 = vunpack.c.l.b16 %v159
    %v231 = vunpack.c.l.b16 %v160
    %v232 = vunpack.c.l.b16 %v161
    %v233 = vunpack.c.l.b16 %v162
    %v234 = vunpack.c.l.b16 %v163
    %v235 = vunpack.c.l.b16 %v164
    %v236 = vunpack.c.l.b16 %v165
    %v237 = vunpack.c.l.b16 %v166
    %v238 = vunpack.c.l.b16 %v167
    %v239 = vunpack.c.l.b16 %v168
    %v240 = vpack.c.b16 %v209, %v208
    %v241 = vpack.c.b16 %v211, %v210
    %v242 = vpack.c.b16 %v213, %v212
    %v243 = vpack.c.b16 %v215, %v214
    %v244 = vpack.c.b16 %v217, %v216
    %v245 = vpack.c.b16 %v219, %v218
    %v246 = vpack.c.b16 %v221, %v220
    %v247 = vpack.c.b16 %v223, %v222
    %v248 = vpack.c.b16 %v225, %v224
    %v249 = vpack.c.b16 %v227, %v226
    %v250 = vpack.c.b16 %v229, %v228
    %v251 = vpack.c.b16 %v231, %v230
    %v252 = vpack.c.b16 %v233, %v232
    %v253 = vpack.c.b16 %v235, %v234
    %v254 = vpack.c.b16 %v237, %v236
    %v255 = vpack.c.b16 %v239, %v238
    %272 = vmatprep.subr.bf16.mxu0 0
    %273 = vmatpush1.bf16.msra.mxu0 %v240
    %274 = vmatprep.subr.bf16.mxu0 0
    %275 = vmatpush1.bf16.msra.mxu0 %v241
    %276 = vmatprep.subr.bf16.mxu0 0
    %277 = vmatpush1.bf16.msra.mxu0 %v242
    %278 = vmatprep.subr.bf16.mxu0 0
    %279 = vmatpush1.bf16.msra.mxu0 %v243
    %280 = vmatprep.subr.bf16.mxu0 0
    %281 = vmatpush1.bf16.msra.mxu0 %v244
    %282 = vmatprep.subr.bf16.mxu0 0
    %283 = vmatpush1.bf16.msra.mxu0 %v245
    %284 = vmatprep.subr.bf16.mxu0 0
    %285 = vmatpush1.bf16.msra.mxu0 %v246
    %286 = vmatprep.subr.bf16.mxu0 0
    %287 = vmatpush1.bf16.msra.mxu0 %v247
    %288 = vmatprep.subr.bf16.mxu0 0
    %289 = vmatpush1.bf16.msra.mxu0 %v248
    %290 = vmatprep.subr.bf16.mxu0 0
    %291 = vmatpush1.bf16.msra.mxu0 %v249
    %292 = vmatprep.subr.bf16.mxu0 0
    %293 = vmatpush1.bf16.msra.mxu0 %v250
    %294 = vmatprep.subr.bf16.mxu0 0
    %295 = vmatpush1.bf16.msra.mxu0 %v251
    %296 = vmatprep.subr.bf16.mxu0 0
    %297 = vmatpush1.bf16.msra.mxu0 %v252
    %298 = vmatprep.subr.bf16.mxu0 0
    %299 = vmatpush1.bf16.msra.mxu0 %v253
    %300 = vmatprep.subr.bf16.mxu0 0
    %301 = vmatpush1.bf16.msra.mxu0 %v254
    %302 = vmatprep.subr.bf16.mxu0 0
    %303 = vmatpush1.bf16.msra.mxu0 %v255
    %304 = vmatprep.mubr.bf16.mxu0 %v136
    %305 = vmatmul.mubr.bf16.gmra.mrb[0].mxu0 %v135
    %v306 = vpop.f32.mrb[0].mxu0
    %v307 = vadd.f32 %v174, %v306
    %v308 = vpop.f32.mrb[0].mxu0
    %v309 = vpop.f32.mrb[0].mxu0
    %v310 = vadd.f32 %v174, %v309
    %v311 = vpop.f32.mrb[0].mxu0
    %312 = vdwg.mxu0
    %v313 = vmax.f32 %v307, 0.0
    %v314 = vmax.f32 %v310, 0.0
    %v315 = vpack.c.bf16 %v314, %v313
    %v316 = vld [vmem:[%s5] sm:$0xf]
    %v317 = vld [vmem:[%s5 + $0x4] sm:$0xf]
    %v318 = vld [vmem:[%s5 + $0x8] sm:$0xf]
    %v319 = vld [vmem:[%s5 + $0xc] sm:$0xf]
    %v320 = vld [vmem:[%s5 + $0x10] sm:$0xf]
    %v321 = vld [vmem:[%s5 + $0x14] sm:$0xf]
    %v322 = vld [vmem:[%s5 + $0x18] sm:$0xf]
    %v323 = vld [vmem:[%s5 + $0x1c] sm:$0xf]
    %v324 = vld [vmem:[%s5 + $0x20] sm:$0xf]
    %v325 = vld [vmem:[%s5 + $0x24] sm:$0xf]
    %v326 = vld [vmem:[%s5 + $0x28] sm:$0xf]
    %v327 = vld [vmem:[%s5 + $0x2c] sm:$0xf]
    %v328 = vld [vmem:[%s5 + $0x30] sm:$0xf]
    %v329 = vld [vmem:[%s5 + $0x34] sm:$0xf]
    %v330 = vld [vmem:[%s5 + $0x38] sm:$0xf]
    %v331 = vld [vmem:[%s5 + $0x3c] sm:$0xf]
    %v332 = vld [vmem:[%s6] sm:$0x1]
    %v334 = vlaneseq
    %v335 = vshrl.u32 %v334, 7
    %v336 = vsub.s32 0, %v335
    %v337 = vrot.slane %v332, %v336
    %v355 = vunpack.c.l.b16 %v316
    %v356 = vunpack.c.l.b16 %v317
    %v357 = vunpack.c.l.b16 %v318
    %v358 = vunpack.c.l.b16 %v319
    %v359 = vunpack.c.l.b16 %v320
    %v360 = vunpack.c.l.b16 %v321
    %v361 = vunpack.c.l.b16 %v322
    %v362 = vunpack.c.l.b16 %v323
    %v363 = vunpack.c.l.b16 %v324
    %v364 = vunpack.c.l.b16 %v325
    %v365 = vunpack.c.l.b16 %v326
    %v366 = vunpack.c.l.b16 %v327
    %v367 = vunpack.c.l.b16 %v328
    %v368 = vunpack.c.l.b16 %v329
    %v369 = vunpack.c.l.b16 %v330
    %v370 = vunpack.c.l.b16 %v331
    %v371 = vpack.c.b16 %v356, %v355
    %v372 = vpack.c.b16 %v358, %v357
    %v373 = vpack.c.b16 %v360, %v359
    %v374 = vpack.c.b16 %v362, %v361
    %v375 = vpack.c.b16 %v364, %v363
    %v376 = vpack.c.b16 %v366, %v365
    %v377 = vpack.c.b16 %v368, %v367
    %v378 = vpack.c.b16 %v370, %v369
    %387 = vmatprep.subr.bf16.mxu0 0
    %388 = vmatpush1.bf16.msra.mxu0 %v371
    %389 = vmatprep.subr.bf16.mxu0 0
    %390 = vmatpush1.bf16.msra.mxu0 %v372
    %391 = vmatprep.subr.bf16.mxu0 0
    %392 = vmatpush1.bf16.msra.mxu0 %v373
    %393 = vmatprep.subr.bf16.mxu0 0
    %394 = vmatpush1.bf16.msra.mxu0 %v374
    %395 = vmatprep.subr.bf16.mxu0 0
    %396 = vmatpush1.bf16.msra.mxu0 %v375
    %397 = vmatprep.subr.bf16.mxu0 0
    %398 = vmatpush1.bf16.msra.mxu0 %v376
    %399 = vmatprep.subr.bf16.mxu0 0
    %400 = vmatpush1.bf16.msra.mxu0 %v377
    %401 = vmatprep.subr.bf16.mxu0 0
    %402 = vmatpush1.bf16.msra.mxu0 %v378
    %403 = vmatprep.subr.bf16.mxu0 0
    %404 = vmatpush1.bf16.msra.mxu0 0
    %405 = vmatprep.subr.bf16.mxu0 0
    %406 = vmatpush1.bf16.msra.mxu0 0
    %407 = vmatprep.subr.bf16.mxu0 0
    %408 = vmatpush1.bf16.msra.mxu0 0
    %409 = vmatprep.subr.bf16.mxu0 0
    %410 = vmatpush1.bf16.msra.mxu0 0
    %411 = vmatprep.subr.bf16.mxu0 0
    %412 = vmatpush1.bf16.msra.mxu0 0
    %413 = vmatprep.subr.bf16.mxu0 0
    %414 = vmatpush1.bf16.msra.mxu0 0
    %415 = vmatprep.subr.bf16.mxu0 0
    %416 = vmatpush1.bf16.msra.mxu0 0
    %417 = vmatprep.subr.bf16.mxu0 0
    %418 = vmatpush1.bf16.msra.mxu0 0
    %419 = vmatprep.mubr.bf16.mxu0 0
    %420 = vmatmul.mubr.bf16.gmra.mrb[0].mxu0 %v315
    %v421 = vpop.f32.mrb[0].mxu0
    %v422 = vadd.f32 %v337, %v421
    %v423 = vpop.f32.mrb[0].mxu0
    %v424 = vpop.f32.mrb[0].mxu0
    %v425 = vadd.f32 %v337, %v424
    %v426 = vpop.f32.mrb[0].mxu0
    %427 = vdwg.mxu0
    %v428 = vmax.f32 %v422, 0.0
    %v429 = vmax.f32 %v425, 0.0
    %v430 = vld [vmem:[%s7] sm:$0x1]
    %v432 = vlaneseq
    %v433 = vshrl.u32 %v432, 7
    %v434 = vsub.s32 0, %v433
    %v435 = vrot.slane %v430, %v434
    %v437 = vmul.f32 %v428, %v435
    %v438 = vmul.f32 %v429, %v435
    %vm439 = vcmask 523264
    %v440 = vsel %vm439, %v437, 0.0
    %441 = vadd.xlane.f32.xlu0 %v440
    %v442 = vpop.xlane.xlu0 %441
    %v443 = vsel %vm439, %v438, 0.0
    %444 = vadd.xlane.f32.xlu0 %v443
    %v445 = vpop.xlane.xlu0 %444
    %v446 = vld [vmem:[#allocation2] sm:$0x1]
    %v448 = vlaneseq
    %v449 = vshrl.u32 %v448, 7
    %v450 = vsub.s32 0, %v449
    %v451 = vrot.slane %v446, %v450
    %v453 = vadd.f32 %v442, %v451
    %v454 = vadd.f32 %v445, %v451
    %v455 = vxor.u32 %v453, 2147483648
    %v456 = vxor.u32 %v454, 2147483648
    %v457 = vmul.f32 %v455, 1.442695
    %v458 = vpow.pop %v457
    %v459 = vmul.f32 %v456, 1.442695
    %v460 = vpow.pop %v459
    %v461 = vadd.f32 %v458, 1.0
    %v462 = vadd.f32 %v460, 1.0
    %v463 = vrcp.pop %v461
    %v464 = vmul.f32 1.0, %v463
    %v465 = vrcp.pop %v462
    %v466 = vmul.f32 1.0, %v465
    %vm467 = vcmask 7168
    %468 = vst.msk [vmem:[%s9] sm:$0xff] %vm467, %v464
    %469 = vst.msk [vmem:[%s9 + $0x8] sm:$0xff] %vm467, %v466
    // Predicated region
    $region42: #{heart_disease_nn_forward.1} parent=1 // pred_check
      _
    $region43: #{heart_disease_nn_forward.1} parent=1 // pred_check_branch
      %471 = sbr.rel (0) target = $region45
    $region44: #{heart_disease_nn_forward.1} parent=1 // pred_region
      _
    $region45: #{heart_disease_nn_forward.1} parent=1 // pred_fallthru
      _
    // Predicated region
    $region46: #{heart_disease_nn_forward.1} parent=1 // pred_check
      _
    $region47: #{heart_disease_nn_forward.1} parent=1 // pred_check_branch
      %473 = sbr.rel (0) target = $region49
    $region48: #{heart_disease_nn_forward.1} parent=1 // pred_region
      _
    $region49: #{heart_disease_nn_forward.1} parent=1 // pred_fallthru
      _
    %474 = vsyncpa [#allocation4], 1

</llo_original>
